<compile_context>
chip_gen: v5e
topology: v5e:2x2
jax: 0.10.0
libtpu: 0.0.40
codegen_flags: <defaults>
</compile_context>

<pallas_src>
import functools
import re

import jax
import jax.numpy as jnp
from jax.experimental import pallas as pl
from jax.experimental.pallas import tpu as pltpu

_LANE = 128
_MAX_TILE_ROWS = 16384          # hard cap keeps in-kernel f32 temporaries bounded


def _cdiv(a, b):
    return -(-a // b)


def _round_up(x, m):
    return _cdiv(x, m) * m


@functools.lru_cache(maxsize=1)
def _tpu_generation():
    """Best-effort TPU generation (5, 6, 7, ...); 0 if unknown."""
    try:
        kind = jax.devices()[0].device_kind or ""
    except Exception:
        return 0
    m = re.search(r"v\s*(\d+)", kind.lower()) or re.search(r"(\d+)", kind)
    return int(m.group(1)) if m else 0


@functools.lru_cache(maxsize=1)
def _config():
    gen = _tpu_generation()
    if gen >= 7:
        # Two TensorCores, ~3.2 TB/s per TC, only 64 MiB VMEM: big tiles,
        # 2-chunk parallel axis, higher tiny-input bypass threshold.
        return dict(num_chunks=2, tile_bytes=4 << 20, vmem_limit=48 << 20,
                    min_pallas_bytes=2 << 20)
    if gen == 6:
        # Single TC, ~1.35 TB/s, 128 MiB VMEM: 4 MiB tiles -> ~90-94% roofline.
        return dict(num_chunks=1, tile_bytes=4 << 20, vmem_limit=64 << 20,
                    min_pallas_bytes=1 << 20)
    if gen > 0:
        # v5e and older: ~0.8 TB/s, 2 MiB tiles are already ~94% efficient.
        return dict(num_chunks=1, tile_bytes=2 << 20, vmem_limit=64 << 20,
                    min_pallas_bytes=1 << 20)
    # Unknown hardware: conservative sizes that fit any generation's VMEM.
    return dict(num_chunks=1, tile_bytes=2 << 20, vmem_limit=48 << 20,
                min_pallas_bytes=1 << 20)


def _make_mse_kernel(tile_rows, tiles_per_chunk, first_masked_tile, valid_rows,
                     needs_mask):
    """Sum-of-squared-differences kernel producing an (8, 128) partial per chunk."""

    def fold(sq):
        # Fold sublane groups into the vreg-sized accumulator with pure VPU adds.
        return sq.reshape(tile_rows // 8, 8, _LANE).sum(axis=0)

    def kernel(a_ref, b_ref, o_ref):
        c = pl.program_id(0)   # chunk ("parallel") axis
        i = pl.program_id(1)   # reduction ("arbitrary") axis

        @pl.when(i == 0)
        def _():
            o_ref[...] = jnp.zeros_like(o_ref)

        # Upcast in-register (keeps HBM traffic at the native dtype width).
        a = a_ref[...].astype(jnp.float32)
        b = b_ref[...].astype(jnp.float32)
        d = a - b
        sq = d * d

        if not needs_mask:
            o_ref[...] += fold(sq)
            return

        tile_idx = c * tiles_per_chunk + i
        is_masked = tile_idx >= first_masked_tile

        # Mask ONLY the tiles that overhang the real data (last partial tile and
        # clamped duplicate tiles); every other step accumulates unmasked.
        @pl.when(jnp.logical_not(is_masked))
        def _():
            o_ref[...] += fold(sq)

        @pl.when(is_masked)
        def _():
            # Rows at/after `valid_rows` hold undefined data from the partial /
            # clamped block: select them to exactly 0 (select discards NaN/inf).
            row = jax.lax.broadcasted_iota(jnp.int32, (tile_rows, 1), 0)
            keep = row < (valid_rows - tile_idx * tile_rows)
            o_ref[...] += fold(jnp.where(keep, sq, 0.0))

    return kernel


def mse_loss_pallas(real_kpts, fake_kpts, *, min_pallas_bytes=None):
    """mean((real_kpts - fake_kpts)**2), Pallas-accelerated for large inputs."""
    assert real_kpts.shape == fake_kpts.shape
    cfg = _config()
    if min_pallas_bytes is None:
        min_pallas_bytes = cfg["min_pallas_bytes"]

    n = real_kpts.size
    itemsize = jnp.dtype(real_kpts.dtype).itemsize
    nbytes = n * itemsize

    # Tiny-input fast path: launch + readback cost dominates for keypoint-sized
    # tensors; XLA's fused reduction is already optimal there.
    if n == 0 or nbytes < min_pallas_bytes:
        d = real_kpts.astype(jnp.float32) - fake_kpts.astype(jnp.float32)
        return jnp.mean(d * d)

    a = real_kpts.reshape(-1)
    b = fake_kpts.reshape(-1)

    # Pad only when not lane-aligned; zero pad on BOTH operands adds exactly 0.
    # TODO(synk): unaligned sizes still pay one host-side pad copy per operand; a
    # manual-DMA (pl.ANY) path with an in-kernel element mask would be zero-copy.
    if n % _LANE != 0:
        pad = _round_up(n, _LANE) - n
        a = jnp.pad(a, (0, pad))
        b = jnp.pad(b, (0, pad))
    rows = a.size // _LANE
    a = a.reshape(rows, _LANE)
    b = b.reshape(rows, _LANE)

    # Native sublane tile of the input dtype: 8 (f32) / 16 (bf16) / 32 (int8).
    sublane = max(8, 32 // itemsize)

    # Constant bytes per grid step across dtypes (per-generation DMA/overhead
    # target), capped so the in-kernel f32 temporaries stay well inside VMEM.
    target_rows = cfg["tile_bytes"] // (_LANE * itemsize)
    tile_rows = max(sublane, min(_MAX_TILE_ROWS, target_rows))
    tile_rows = min(tile_rows, _round_up(rows, sublane))
    tile_rows = _round_up(tile_rows, sublane)

    num_tiles = _cdiv(rows, tile_rows)
    num_chunks = cfg["num_chunks"] if num_tiles >= cfg["num_chunks"] else 1
    tiles_per_chunk = _cdiv(num_tiles, num_chunks)
    covered_rows = num_chunks * tiles_per_chunk * tile_rows
    needs_mask = covered_rows > rows
    # Tiles with index >= first_masked_tile overhang the real data and must be
    # row-masked (covers the partial last tile AND clamped duplicate tiles from
    # chunk overhang).  Keep this invariant in sync with in_index_map's clamp.
    first_masked_tile = rows // tile_rows

    def in_index_map(c, i):
        tile_idx = c * tiles_per_chunk + i
        # Clamp overhanging steps to a valid block; their contribution is
        # masked to zero inside the kernel.
        return (jnp.minimum(tile_idx, num_tiles - 1), 0)

    kernel = _make_mse_kernel(tile_rows, tiles_per_chunk, first_masked_tile,
                              rows, needs_mask)

    out_bytes = num_chunks * 8 * _LANE * 4
    cost = pl.CostEstimate(flops=3 * n, transcendentals=0,
                           bytes_accessed=2 * a.size * itemsize + out_bytes)

    partials = pl.pallas_call(
        kernel,
        out_shape=jax.ShapeDtypeStruct((num_chunks * 8, _LANE), jnp.float32),
        grid_spec=pltpu.PrefetchScalarGridSpec(
            num_scalar_prefetch=0,
            grid=(num_chunks, tiles_per_chunk),
            in_specs=[
                pl.BlockSpec((tile_rows, _LANE), in_index_map),
                pl.BlockSpec((tile_rows, _LANE), in_index_map),
            ],
            out_specs=pl.BlockSpec((8, _LANE), lambda c, i: (c, 0)),
        ),
        compiler_params=pltpu.CompilerParams(
            # TODO(synk): on v7x, verify "parallel" shards the chunk axis across
            # both TensorCores; if not, switch it to pltpu.CORE_PARALLEL.
            dimension_semantics=("parallel", "arbitrary"),
            vmem_limit_bytes=cfg["vmem_limit"],
        ),
        cost_estimate=cost,
    )(a, b)

    # TODO(synk): the final cross-lane reduce + /n could be folded into the
    # kernel's last step (idle XLU slot) to drop this small extra XLA dispatch.
    return (jnp.sum(partials) / jnp.float32(n)).astype(jnp.float32)


def custom_loss_forward(real_vtx, pred_vtx, real_kpts, fake_kpts):
    # Matches customLoss.forward: vertices are ignored, only keypoint MSE.
    del real_vtx, pred_vtx
    return mse_loss_pallas(real_kpts, fake_kpts)


if __name__ == "__main__":
    keys = jax.random.split(jax.random.PRNGKey(0), 10)

    # Small shapes consistent with the module: vertices (B, V, 3), keypoints (B, K, 3).
    B, V, K = 2, 16, 8
    real_vtx = jax.random.normal(keys[0], (B, V, 3), dtype=jnp.float32)
    pred_vtx = jax.random.normal(keys[1], (B, V, 3), dtype=jnp.float32)
    real_kpts = jax.random.normal(keys[2], (B, K, 3), dtype=jnp.float32)
    fake_kpts = jax.random.normal(keys[3], (B, K, 3), dtype=jnp.float32)

    loss = custom_loss_forward(real_vtx, pred_vtx, real_kpts, fake_kpts)
    jax.block_until_ready(loss)
    ref = jnp.mean((real_kpts - fake_kpts) ** 2)
    assert jnp.allclose(loss, ref, rtol=1e-6, atol=1e-6), (loss, ref)

    # Force the Pallas path on the tiny keypoint shapes (single masked tile:
    # 48 elements -> 1 padded lane row, 8-row block).
    loss_k = mse_loss_pallas(real_kpts, fake_kpts, min_pallas_bytes=0)
    jax.block_until_ready(loss_k)
    assert jnp.allclose(loss_k, ref, rtol=1e-6, atol=1e-6), (loss_k, ref)

    # Lane-aligned f32 input (zero-copy path, single unmasked tile).
    xa = jax.random.normal(keys[4], (4, 4096, 32), dtype=jnp.float32)
    xb = jax.random.normal(keys[5], (4, 4096, 32), dtype=jnp.float32)
    got = mse_loss_pallas(xa, xb)
    ref2 = jnp.mean((xa - xb) ** 2)
    assert jnp.allclose(got, ref2, rtol=1e-5, atol=1e-6), (got, ref2)

    # Multi-tile + unaligned: exercises unmasked tiles, the masked final tile,
    # host padding, and (on v7x) the clamped duplicate chunk tile.
    ya = jax.random.normal(keys[6], (1_200_003,), dtype=jnp.float32)
    yb = jax.random.normal(keys[7], (1_200_003,), dtype=jnp.float32)
    got_u = mse_loss_pallas(ya, yb)
    ref_u = jnp.mean((ya - yb) ** 2)
    assert jnp.allclose(got_u, ref_u, rtol=2e-5, atol=1e-6), (got_u, ref_u)

    # bf16 inputs: native-dtype DMA, native 16-sublane tile, in-kernel f32 upcast.
    za = jax.random.normal(keys[8], (2, 2048, 128), dtype=jnp.float32).astype(jnp.bfloat16)
    zb = jax.random.normal(keys[9], (2, 2048, 128), dtype=jnp.float32).astype(jnp.bfloat16)
    got_bf = mse_loss_pallas(za, zb)
    ref_bf = jnp.mean((za.astype(jnp.float32) - zb.astype(jnp.float32)) ** 2)
    assert jnp.allclose(got_bf, ref_bf, rtol=1e-5, atol=1e-6), (got_bf, ref_bf)

    jax.block_until_ready((got, got_u, got_bf))
    print("KERNEL_OK")
</pallas_src>

<mosaic_0001>
module attributes {stable_mosaic.version = 11 : i64} {
  func.func @kernel(%arg0: i32, %arg1: i32, %arg2: memref<8x128xf32, #tpu.memory_space<vmem>>, %arg3: memref<8x128xf32, #tpu.memory_space<vmem>>, %arg4: memref<8x128xf32, #tpu.memory_space<vmem>>) attributes {dimension_semantics = [#tpu.dimension_semantics<parallel>, #tpu.dimension_semantics<arbitrary>], iteration_bounds = array<i64: 1, 1>, scalar_prefetch = 0 : i64, scratch_operands = 0 : i64, tpu.core_type = #tpu.core_type<tc>, window_params = [{transform_indices = @transform_0, window_bounds = array<i64: 8, 128>}, {transform_indices = @transform_1, window_bounds = array<i64: 8, 128>}, {transform_indices = @transform_2, window_bounds = array<i64: 8, 128>}]} {
    %c0_i32 = arith.constant 0 : i32
    %0 = arith.cmpi eq, %arg1, %c0_i32 : i32
    %1 = arith.extui %0 : i1 to i32
    %c0_i32_0 = arith.constant 0 : i32
    %2 = arith.cmpi ne, %1, %c0_i32_0 : i32
    scf.if %2 {
      %cst = arith.constant 0.000000e+00 : f32
      %15 = vector.broadcast %cst : f32 to vector<8x128xf32>
      %c0_7 = arith.constant 0 : index
      %c0_8 = arith.constant 0 : index
      %16 = vector.load %arg4[%c0_7, %c0_8] : memref<8x128xf32, #tpu.memory_space<vmem>>, vector<8x128xf32>
      tpu.vector_store %arg4[%c0_7, %c0_8], %15 {strides = array<i32>} : memref<8x128xf32, #tpu.memory_space<vmem>>, vector<8x128xf32>,
    } else {
    }
    %c0 = arith.constant 0 : index
    %c0_1 = arith.constant 0 : index
    %3 = vector.load %arg2[%c0, %c0_1] : memref<8x128xf32, #tpu.memory_space<vmem>>, vector<8x128xf32>
    %c0_2 = arith.constant 0 : index
    %c0_3 = arith.constant 0 : index
    %4 = vector.load %arg3[%c0_2, %c0_3] : memref<8x128xf32, #tpu.memory_space<vmem>>, vector<8x128xf32>
    %5 = arith.subf %3, %4 : vector<8x128xf32>
    %6 = arith.mulf %5, %5 : vector<8x128xf32>
    %c1_i32 = arith.constant 1 : i32
    %7 = arith.muli %arg0, %c1_i32 : i32
    %8 = arith.addi %7, %arg1 : i32
    %c0_i32_4 = arith.constant 0 : i32
    %9 = arith.cmpi sge, %8, %c0_i32_4 : i32
    %true = arith.constant true
    %10 = arith.xori %9, %true : i1
    %11 = arith.extui %10 : i1 to i32
    %c0_i32_5 = arith.constant 0 : i32
    %12 = arith.cmpi ne, %11, %c0_i32_5 : i32
    scf.if %12 {
      %c0_7 = arith.constant 0 : index
      %c0_8 = arith.constant 0 : index
      %15 = vector.load %arg4[%c0_7, %c0_8] : memref<8x128xf32, #tpu.memory_space<vmem>>, vector<8x128xf32>
      %16 = vector.shape_cast %6 : vector<8x128xf32> to vector<1x8x128xf32>
      %cst = arith.constant dense<0.000000e+00> : vector<8x128xf32>
      %17 = vector.multi_reduction <add>, %16, %cst [0] : vector<1x8x128xf32> to vector<8x128xf32>
      %18 = arith.addf %15, %17 : vector<8x128xf32>
      %c0_9 = arith.constant 0 : index
      %c0_10 = arith.constant 0 : index
      %19 = vector.load %arg4[%c0_9, %c0_10] : memref<8x128xf32, #tpu.memory_space<vmem>>, vector<8x128xf32>
      tpu.vector_store %arg4[%c0_9, %c0_10], %18 {strides = array<i32>} : memref<8x128xf32, #tpu.memory_space<vmem>>, vector<8x128xf32>,
    } else {
    }
    %13 = arith.extui %9 : i1 to i32
    %c0_i32_6 = arith.constant 0 : i32
    %14 = arith.cmpi ne, %13, %c0_i32_6 : i32
    scf.if %14 {
      %15 = tpu.iota {dimensions = array<i32: 0>} : vector<8x1xi32>
      %c8_i32 = arith.constant 8 : i32
      %16 = arith.muli %8, %c8_i32 : i32
      %c1_i32_7 = arith.constant 1 : i32
      %17 = arith.subi %c1_i32_7, %16 : i32
      %18 = vector.broadcast %17 : i32 to vector<8x1xi32>
      %19 = arith.cmpi slt, %15, %18 : vector<8x1xi32>
      %c0_8 = arith.constant 0 : index
      %c0_9 = arith.constant 0 : index
      %20 = vector.load %arg4[%c0_8, %c0_9] : memref<8x128xf32, #tpu.memory_space<vmem>>, vector<8x128xf32>
      %cst = arith.constant 0.000000e+00 : f32
      %21 = vector.shape_cast %19 : vector<8x1xi1> to vector<8x1xi1>
      %22 = vector.broadcast %21 : vector<8x1xi1> to vector<8x128xi1>
      %23 = vector.broadcast %cst : f32 to vector<8x128xf32>
      %24 = arith.select %22, %6, %23 : vector<8x128xi1>, vector<8x128xf32>
      %25 = vector.shape_cast %24 : vector<8x128xf32> to vector<1x8x128xf32>
      %cst_10 = arith.constant dense<0.000000e+00> : vector<8x128xf32>
      %26 = vector.multi_reduction <add>, %25, %cst_10 [0] : vector<1x8x128xf32> to vector<8x128xf32>
      %27 = arith.addf %20, %26 : vector<8x128xf32>
      %c0_11 = arith.constant 0 : index
      %c0_12 = arith.constant 0 : index
      %28 = vector.load %arg4[%c0_11, %c0_12] : memref<8x128xf32, #tpu.memory_space<vmem>>, vector<8x128xf32>
      tpu.vector_store %arg4[%c0_11, %c0_12], %27 {strides = array<i32>} : memref<8x128xf32, #tpu.memory_space<vmem>>, vector<8x128xf32>,
    } else {
    }
    return
  }
  func.func @transform_0(%arg0: i32, %arg1: i32) -> (i32, i32) {
    %c1_i32 = arith.constant 1 : i32
    %0 = arith.muli %arg0, %c1_i32 : i32
    %1 = arith.addi %0, %arg1 : i32
    %c0_i32 = arith.constant 0 : i32
    %2 = arith.minsi %1, %c0_i32 : i32
    %c0_i32_0 = arith.constant 0 : i32
    %c0_i32_1 = arith.constant 0 : i32
    return %2, %c0_i32_0 : i32, i32
  }
  func.func @transform_1(%arg0: i32, %arg1: i32) -> (i32, i32) {
    %c1_i32 = arith.constant 1 : i32
    %0 = arith.muli %arg0, %c1_i32 : i32
    %1 = arith.addi %0, %arg1 : i32
    %c0_i32 = arith.constant 0 : i32
    %2 = arith.minsi %1, %c0_i32 : i32
    %c0_i32_0 = arith.constant 0 : i32
    %c0_i32_1 = arith.constant 0 : i32
    return %2, %c0_i32_0 : i32, i32
  }
  func.func @transform_2(%arg0: i32, %arg1: i32) -> (i32, i32) {
    %c0_i32 = arith.constant 0 : i32
    %c0_i32_0 = arith.constant 0 : i32
    return %arg0, %c0_i32 : i32, i32
  }
}

</mosaic_0001>

<llo_original>
// kernel: tpu_custom_call.1
$region0: #{tpu_custom_call.1}
  #allocation0 [shape = 'u32[]', space=smem, size = 0x4, offset = 0x4, fixed_abs, tag = 'smem constant byte address 0x4 - core index']
  #allocation1 [shape = 'u32[72,128]{1,0:T(1,128)}', space=vmem, size = 0x9000, scoped, tag = 'internal scratch']
  %s0 = inlined_call_operand.hbm [shape: f32[1,128], index: 0, kind: input, shape index: {}]
  %s1 = inlined_call_operand.hbm [shape: f32[1,128], index: 1, kind: input, shape index: {}]
  %s2 = inlined_call_operand.hbm [shape: f32[8,128], index: 2, kind: output, shape index: {}]
  %s3 = sld [smem:[#allocation0]]
  $region38: #{tpu_custom_call.1} parent=0
    _
  %s5 = ssub.s32 1, %s3
  %s6 = scalar_select 0, %s5, %s3
  $region1: #{tpu_custom_call.1} parent=0
    #allocation2 [shape = 'u8[4096]{0}', space=vmem, size = 0x1000, scoped, tag = 'input window, operand 0, single buffered']
    #allocation3 [shape = 's32[1]{0}', space=sflag, size = 0x4, scoped, tag = 'scoped memory for tpu_custom_call.1']
    #allocation4 [shape = 's32[1]{0}', space=sflag, size = 0x4, scoped, tag = 'scoped memory for tpu_custom_call.1']
    #allocation5 [shape = 'u8[4096]{0}', space=vmem, size = 0x1000, scoped, tag = 'input window, operand 1, single buffered']
    #allocation6 [shape = 's32[1]{0}', space=sflag, size = 0x4, scoped, tag = 'scoped memory for tpu_custom_call.1']
    #allocation7 [shape = 'u8[4096]{0}', space=vmem, size = 0x1000, scoped, tag = 'output window, operand 0, single buffered']
    %7 = vsyncpa [#allocation3], 0
    %8 = vsyncpa [#allocation6], 0
    %9 = vsyncpa [#allocation4], 0
    // Predicated region
    $region2: #{tpu_custom_call.1} parent=1 // pred_check
      _
    $region3: #{tpu_custom_call.1} parent=1 // pred_check_branch
      %11 = sbr.rel (0) target = $region5
    $region4: #{tpu_custom_call.1} parent=1 // pred_region
      %s12 = sadd.s32 0, 0
      %p13 = scmp.lt.s32.totalorder %s12, 0
      %s14 = scalar_select %p13, %s12, 0
      %s15 = smul.u32 8, %s14
      %s16 = ssub.s32 1, %s15
      %s17 = ssub.s32 8, %s16
      %s18 = sshll.u32 %s17, 4
      %19 = vsyncadd [#allocation3], %s18
      %p20 = scmp.ne.s32.totalorder 0, %s16
      %s21 = scalar_lea.hbm %s0, %s15
      %s22 = sshll.u32 %s21, 4
      %s23 = int_to_ptr.hbm [resolvable:$true] %s22
      %s24 = sshll.u32 [#allocation2], 4
      %s25 = int_to_ptr.vmem [resolvable:$true] %s24
      %s26 = sshll.u32 %s16, 4
      %30 = dma.hbm_to_vmem [thread:$0]  (%p20), %s23, %s26, %s25, [#allocation3], 16, 16, 1
    $region5: #{tpu_custom_call.1} parent=1 // pred_fallthru
      _
    // Predicated region
    $region6: #{tpu_custom_call.1} parent=1 // pred_check
      _
    $region7: #{tpu_custom_call.1} parent=1 // pred_check_branch
      %32 = sbr.rel (0) target = $region9
    $region8: #{tpu_custom_call.1} parent=1 // pred_region
      %s33 = sadd.s32 0, 0
      %p34 = scmp.lt.s32.totalorder %s33, 0
      %s35 = scalar_select %p34, %s33, 0
      %s36 = smul.u32 8, %s35
      %s37 = ssub.s32 1, %s36
      %s38 = ssub.s32 8, %s37
      %s39 = sshll.u32 %s38, 4
      %40 = vsyncadd [#allocation6], %s39
      %p41 = scmp.ne.s32.totalorder 0, %s37
      %s42 = scalar_lea.hbm %s1, %s36
      %s43 = sshll.u32 %s42, 4
      %s44 = int_to_ptr.hbm [resolvable:$true] %s43
      %s45 = sshll.u32 [#allocation5], 4
      %s46 = int_to_ptr.vmem [resolvable:$true] %s45
      %s47 = sshll.u32 %s37, 4
      %51 = dma.hbm_to_vmem [thread:$0]  (%p41), %s44, %s47, %s46, [#allocation6], 16, 16, 1
    $region9: #{tpu_custom_call.1} parent=1 // pred_fallthru
      _
    // Predicated region
    $region10: #{tpu_custom_call.1} parent=1 // pred_check
      _
    $region11: #{tpu_custom_call.1} parent=1 // pred_check_branch
      %53 = sbr.rel (0) target = $region13
    $region12: #{tpu_custom_call.1} parent=1 // pred_region
      %55 = dma.done [#allocation3], 128
    $region13: #{tpu_custom_call.1} parent=1 // pred_fallthru
      _
    // Predicated region
    $region14: #{tpu_custom_call.1} parent=1 // pred_check
      _
    $region15: #{tpu_custom_call.1} parent=1 // pred_check_branch
      %57 = sbr.rel (0) target = $region17
    $region16: #{tpu_custom_call.1} parent=1 // pred_region
      %59 = dma.done [#allocation6], 128
    $region17: #{tpu_custom_call.1} parent=1 // pred_fallthru
      _
    %s60 = sadd.s32 0, 0
    %p61 = scmp.lt.s32.totalorder %s60, 0
    %s62 = scalar_select %p61, %s60, 0
    %s63 = smul.u32 8, %s62
    %s64 = ssub.s32 1, %s63
    %s65 = sadd.s32 0, 0
    %p66 = scmp.lt.s32.totalorder %s65, 0
    %s67 = scalar_select %p66, %s65, 0
    %s68 = smul.u32 8, %s67
    %s69 = ssub.s32 1, %s68
    %p70 = scmp.eq.s32.totalorder 0, 0
    // Predicated region
    $region18: #{tpu_custom_call.1} parent=1 // pred_check
      %p71 = pneg %p70
    $region19: #{tpu_custom_call.1} parent=1 // pred_check_branch
      %73 = sbr.rel (%p71) target = $region21
    $region20: #{tpu_custom_call.1} parent=1 // pred_region
      %74 = vst [vmem:[#allocation7] sm:$0xff] 0.0
    $region21: #{tpu_custom_call.1} parent=1 // pred_fallthru
      _
    %v75 = vld [vmem:[#allocation2] sm:$0xff]
    %v76 = vld [vmem:[#allocation5] sm:$0xff]
    %v77 = vsub.f32 %v75, %v76
    %v78 = vmul.f32 %v77, %v77
    %s79 = sadd.s32 0, 0
    %p80 = scmp.ge.s32.totalorder %s79, 0
    %p81 = scmp.lt.s32.totalorder %s79, 0
    // Predicated region
    $region22: #{tpu_custom_call.1} parent=1 // pred_check
      %p82 = pneg %p81
    $region23: #{tpu_custom_call.1} parent=1 // pred_check_branch
      %84 = sbr.rel (%p82) target = $region25
    $region24: #{tpu_custom_call.1} parent=1 // pred_region
      %v85 = vld [vmem:[#allocation7] sm:$0xff]
      %v86 = vadd.f32 %v78, 0.0
      %v87 = vadd.f32 %v85, %v86
      %88 = vst [vmem:[#allocation7] sm:$0xff] %v87
    $region25: #{tpu_custom_call.1} parent=1 // pred_fallthru
      _
    // Predicated region
    $region26: #{tpu_custom_call.1} parent=1 // pred_check
      %p89 = pneg %p80
    $region27: #{tpu_custom_call.1} parent=1 // pred_check_branch
      %91 = sbr.rel (%p89) target = $region29
    $region28: #{tpu_custom_call.1} parent=1 // pred_region
      %v92 = vlaneseq
      %v93 = vshrl.u32 %v92, 7
      %s94 = smul.u32 %s79, 8
      %s95 = ssub.s32 1, %s94
      %v96 = vstv %s95
      %vm97 = vcmp.lt.s32.totalorder %v93, %v96
      %v98 = vld [vmem:[#allocation7] sm:$0xff]
      %v99 = vsel %vm97, 1, 0
      %vm100 = vcmp.eq.s32.totalorder %v99, 1
      %v101 = vsel %vm100, %v78, 0.0
      %v102 = vadd.f32 %v101, 0.0
      %v103 = vadd.f32 %v98, %v102
      %104 = vst [vmem:[#allocation7] sm:$0xff] %v103
    $region29: #{tpu_custom_call.1} parent=1 // pred_fallthru
      _
    // Predicated region
    $region30: #{tpu_custom_call.1} parent=1 // pred_check
      _
    $region31: #{tpu_custom_call.1} parent=1 // pred_check_branch
      %106 = sbr.rel (0) target = $region33
    $region32: #{tpu_custom_call.1} parent=1 // pred_region
      %108 = vsyncadd [#allocation4], 0
      %s110 = sshll.u32 [#allocation7], 4
      %s111 = int_to_ptr.vmem [resolvable:$true] %s110
      %s112 = sshll.u32 %s2, 4
      %s113 = int_to_ptr.hbm [resolvable:$true] %s112
      %115 = dma.vmem_to_hbm [thread:$0]  %s111, 128, %s113, [#allocation4]
    $region33: #{tpu_custom_call.1} parent=1 // pred_fallthru
      _
    // Predicated region
    $region34: #{tpu_custom_call.1} parent=1 // pred_check
      _
    $region35: #{tpu_custom_call.1} parent=1 // pred_check_branch
      %117 = sbr.rel (0) target = $region37
    $region36: #{tpu_custom_call.1} parent=1 // pred_region
      %119 = dma.done [#allocation4], 128
    $region37: #{tpu_custom_call.1} parent=1 // pred_fallthru
      _
    %120 = vsyncpa [#allocation3], 1
    %121 = vsyncpa [#allocation6], 1
    %122 = vsyncpa [#allocation4], 1

</llo_original>
